<compile_context>
chip_gen: v5e
topology: v5e:2x2
jax: 0.10.0
libtpu: 0.0.40
codegen_flags: <defaults>
</compile_context>

<pallas_src>
import functools
import math

import jax
import jax.numpy as jnp
from jax.experimental import pallas as pl
from jax.experimental.pallas import tpu as pltpu


def _swish(x):
    # NOTE: if profiling ever shows the VALU slot saturated, the divide can be
    # moved to the EUP with x * pl.reciprocal(1 + jnp.exp(-x), approx=True).
    return x * jax.nn.sigmoid(x)


def _round_up(a, m):
    return ((a + m - 1) // m) * m


def _cdiv(a, b):
    return (a + b - 1) // b


# ----------------------------------------------------------------------------
# Fused kernel: encoder (n linears + swish between) -> encoded output,
# swish(encoded) -> decoder (n linears + swish between) -> recon output.
# All intermediates stay on-chip; only x, the params and the two outputs
# cross the HBM boundary.
# ----------------------------------------------------------------------------
def _fused_ae_kernel(n_layers, x_ref, *refs):
    enc_w = refs[0:n_layers]                       # (d_i, d_{i+1})  [in, out]
    enc_b = refs[n_layers:2 * n_layers]            # (1, d_{i+1}) f32
    dec_w = refs[2 * n_layers:3 * n_layers]        # (in, out)
    dec_b = refs[3 * n_layers:4 * n_layers]        # (1, out) f32
    enc_out_ref = refs[4 * n_layers]
    rec_out_ref = refs[4 * n_layers + 1]

    # ---- encoder ----
    h = x_ref[...]
    for i in range(n_layers):
        w = enc_w[i][...]
        h = jnp.dot(h.astype(w.dtype), w, preferred_element_type=jnp.float32)
        h = h + enc_b[i][...].astype(jnp.float32)
        if i < n_layers - 1:
            h = _swish(h)
    # no layer_norm, no add_activation (module defaults)
    enc_out_ref[...] = h.astype(enc_out_ref.dtype)

    # ---- decoder (add_activation=False -> swish the encoded feats first) ----
    r = _swish(h)
    for i in range(n_layers):
        w = dec_w[i][...]
        r = jnp.dot(r.astype(w.dtype), w, preferred_element_type=jnp.float32)
        r = r + dec_b[i][...].astype(jnp.float32)
        if i < n_layers - 1:
            r = _swish(r)
    rec_out_ref[...] = r.astype(rec_out_ref.dtype)


def _resident_spec(arr, single_buffer):
    """Full-array block, constant index map -> stays in VMEM across tiles."""
    nd = arr.ndim
    idx = lambda i: (0,) * nd
    if single_buffer:
        # Constant blocks never change across grid steps -> 1 buffer is enough,
        # halving the VMEM footprint of all resident params (key on v7x 64 MiB).
        return pl.BlockSpec(arr.shape, idx, pipeline_mode=pl.Buffered(1))
    return pl.BlockSpec(arr.shape, idx)


def tied_autoencoder_forward_fused(x, fused_params, *, d_latent=None,
                                   tile_m=512, single_buffer_params=True):
    """x: (B, shape_list[0]).  fused_params from prepare_fused_params().

    Returns (encoded_feats[B, d_latent], reconstruction[B, shape_list[0]]).
    `d_latent` is the UNpadded latent width (shape_list[-1]); if None the
    lane-padded encoded features are returned.
    """
    enc_w, enc_b, dec_w, dec_b = fused_params
    n = len(enc_w)
    B, D0 = x.shape
    d_lat_pad = enc_w[-1].shape[1]      # lane-padded latent width
    d0_pad = dec_w[-1].shape[1]         # lane-padded recon width
    assert enc_w[0].shape[0] == D0, "x feature dim does not match encoder"

    SUB = 16  # sublane alignment (covers bf16 packing too)

    # Only a tiny alignment pad (<=15 rows) and only when B is not 16-aligned;
    # ragged last tiles are otherwise handled by Pallas without padding x.
    B_align = _round_up(B, SUB)
    if B_align != B:
        x = jnp.pad(x, ((0, B_align - B), (0, 0)))

    TM = min(_round_up(tile_m, SUB), B_align)
    n_steps = _cdiv(B_align, TM)
    if n_steps == 1 and B_align >= 2 * SUB:
        # >=2 batch tiles so both TensorCores on a v7x chip get work.
        TM = _round_up(_cdiv(B_align, 2), SUB)
        n_steps = _cdiv(B_align, TM)

    kernel = functools.partial(_fused_ae_kernel, n)
    params_all = tuple(enc_w) + tuple(enc_b) + tuple(dec_w) + tuple(dec_b)

    in_specs = ([pl.BlockSpec((TM, D0), lambda i: (i, 0))]
                + [_resident_spec(p, single_buffer_params) for p in params_all])
    out_specs = (pl.BlockSpec((TM, d_lat_pad), lambda i: (i, 0)),
                 pl.BlockSpec((TM, d0_pad), lambda i: (i, 0)))
    out_shape = (jax.ShapeDtypeStruct((B_align, d_lat_pad), x.dtype),
                 jax.ShapeDtypeStruct((B_align, d0_pad), x.dtype))

    # ---- VMEM budget: resident params (x buffers) + pipelined I/O tiles ----
    itemsize = x.dtype.itemsize
    param_bufs = 1 if single_buffer_params else 2
    param_bytes = sum(int(p.size) * p.dtype.itemsize for p in params_all)
    # TODO(synk): if param_bytes exceeds ~40 MiB (v7x has 64 MiB VMEM/TC), the
    # all-weights-resident strategy should be replaced by a streamed
    # (grid/emit_pipeline) weight path; not implemented here.
    io_bytes = 2 * TM * (D0 + d_lat_pad + d0_pad) * itemsize
    need = param_bufs * param_bytes + io_bytes + (8 << 20)      # headroom
    try:
        cap = int(pltpu.get_tpu_info().vmem_capacity_bytes * 0.9)
    except Exception:
        cap = 100 << 20
    vmem_limit = int(max(32 << 20, min(need, cap)))

    # ---- advisory cost estimate for the XLA scheduler ----
    flops = sum(2 * B_align * w.shape[0] * w.shape[1] for w in (*enc_w, *dec_w))
    transc = B_align * (sum(w.shape[1] for w in enc_w[:-1])
                        + enc_w[-1].shape[1]
                        + sum(w.shape[1] for w in dec_w[:-1]))
    bytes_accessed = (int(x.size) * itemsize + param_bytes
                      + B_align * (d_lat_pad + d0_pad) * itemsize)

    enc, rec = pl.pallas_call(
        kernel,
        out_shape=out_shape,
        grid_spec=pl.GridSpec(
            grid=(n_steps,),
            in_specs=in_specs,
            out_specs=out_specs,
        ),
        compiler_params=pltpu.CompilerParams(
            dimension_semantics=("parallel",),
            vmem_limit_bytes=vmem_limit),
        cost_estimate=pl.CostEstimate(
            flops=int(flops), transcendentals=int(transc),
            bytes_accessed=int(bytes_accessed)),
    )(x, *params_all)

    # Slice off batch-alignment rows and lane padding (done outside the kernel
    # so all in-kernel stores stay lane-dense / unmasked).
    if B_align != B:
        enc = enc[:B]
        rec = rec[:B]
    if d_latent is not None and d_latent != d_lat_pad:
        enc = enc[:, :d_latent]
    if d0_pad != D0:
        rec = rec[:, :D0]
    return enc, rec


# ----------------------------------------------------------------------------
# Parameter construction (deterministic, mirrors reset_parameters()), kept in
# the PyTorch (out, in) layout so the reference matches the original module.
# ----------------------------------------------------------------------------
def init_params(shape_list, key):
    weight_list, reverse_weight_list, bias_list, recon_bias_list = [], [], [], []
    for i in range(len(shape_list) - 1):
        fan_in, fan_out = shape_list[i], shape_list[i + 1]
        key, k1, k2, k3, k4 = jax.random.split(key, 5)
        # kaiming_uniform_, a=0, leaky_relu => gain = sqrt(2); bound = sqrt(6/fan)
        w_bound = math.sqrt(6.0 / fan_in)
        rw_bound = math.sqrt(6.0 / fan_out)
        w = jax.random.uniform(k1, (fan_out, fan_in), jnp.float32,
                               -w_bound, w_bound)
        rw = jax.random.uniform(k2, (fan_out, fan_in), jnp.float32,
                                -rw_bound, rw_bound)
        b = jax.random.uniform(k3, (fan_out,), jnp.float32,
                               -1.0 / math.sqrt(fan_in), 1.0 / math.sqrt(fan_in))
        rb = jax.random.uniform(k4, (fan_in,), jnp.float32,
                                -1.0 / math.sqrt(fan_out), 1.0 / math.sqrt(fan_out))
        weight_list.append(w)
        reverse_weight_list.append(rw)
        bias_list.append(b)
        recon_bias_list.append(rb)
    # Same list reversals as the PyTorch module.
    reverse_weight_list = reverse_weight_list[::-1]
    recon_bias_list = recon_bias_list[::-1]
    return weight_list, reverse_weight_list, bias_list, recon_bias_list


def prepare_fused_params(params, *, param_dtype=jnp.float32, lane=128):
    """One-time layout prep:
       * encoder weights -> (in, out); decoder reverse weights are already
         (in, out) after the module's list reversal (no transpose needed).
       * biases -> (1, D), kept in f32 (added post-accumulation).
       * the dims that are WRITTEN to HBM (encoder latent, decoder output) are
         zero-padded to multiples of 128 so stores are lane-dense; the zero
         padding is exact (swish(0)=0, 0·w=0) and sliced off outside.
       * weights optionally cast to bf16 (param_dtype) for the native MXU path.
    """
    weight_list, reverse_weight_list, bias_list, recon_bias_list = params
    n = len(weight_list)

    def pad2(a, rows, cols):
        r, c = a.shape
        if r == rows and c == cols:
            return a
        return jnp.pad(a, ((0, rows - r), (0, cols - c)))

    enc_w, enc_b = [], []
    for i in range(n):
        w = jnp.asarray(weight_list[i]).T                    # (in, out)
        b = jnp.asarray(bias_list[i]).reshape(1, -1)
        if i == n - 1:                                       # latent dim -> lane-dense
            out_pad = _round_up(w.shape[1], lane)
            w = pad2(w, w.shape[0], out_pad)
            b = pad2(b, 1, out_pad)
        enc_w.append(w.astype(param_dtype))
        enc_b.append(b.astype(jnp.float32))

    dec_w, dec_b = [], []
    for i in range(n):
        w = jnp.asarray(reverse_weight_list[i])              # already (in, out)
        b = jnp.asarray(recon_bias_list[i]).reshape(1, -1)
        in_pad, out_pad = w.shape
        if i == 0:                                           # match padded latent
            in_pad = _round_up(in_pad, lane)
        if i == n - 1:                                       # recon dim -> lane-dense
            out_pad = _round_up(out_pad, lane)
        w = pad2(w, in_pad, out_pad)
        b = pad2(b, 1, out_pad)
        dec_w.append(w.astype(param_dtype))
        dec_b.append(b.astype(jnp.float32))

    return enc_w, enc_b, dec_w, dec_b


# ----------------------------------------------------------------------------
# Pure-JAX reference (PyTorch semantics) for verification.
# ----------------------------------------------------------------------------
def reference_forward(x, params):
    weight_list, reverse_weight_list, bias_list, recon_bias_list = params
    n = len(weight_list)
    h = x
    for i in range(n):
        h = h @ weight_list[i].T + bias_list[i]
        if i < n - 1:
            h = _swish(h)
    enc = h
    r = _swish(enc)
    for i in range(n):
        r = r @ reverse_weight_list[i] + recon_bias_list[i]
        if i < n - 1:
            r = _swish(r)
    return enc, r


def _run_forward(x, fused_params, d_latent):
    """Runs the fused kernel; falls back to default (double-buffered) resident
    params if this JAX build rejects pipeline_mode=pl.Buffered(1)."""
    last_err = None
    for single_buf in (True, False):
        try:
            fwd = jax.jit(functools.partial(
                tied_autoencoder_forward_fused,
                d_latent=d_latent, single_buffer_params=single_buf))
            enc, rec = fwd(x, fused_params)
            jax.block_until_ready((enc, rec))
            return enc, rec
        except Exception as e:                               # noqa: BLE001
            last_err = e
    raise last_err


if __name__ == "__main__":
    # TODO(synk): optional dropout / LayerNorm / add_activation paths (all
    # disabled by module defaults) are not implemented in the fused kernel.
    shape_list = [64, 32, 16]
    batch = 8

    key = jax.random.PRNGKey(0)
    key, kx = jax.random.split(key)
    x = jax.random.normal(kx, (batch, shape_list[0]), dtype=jnp.float32)
    params = init_params(shape_list, key)
    enc_ref, recon_ref = reference_forward(x, params)

    # ---- float32 parameters: tight check against the reference ----
    fused_f32 = prepare_fused_params(params, param_dtype=jnp.float32)
    enc, recon = _run_forward(x, fused_f32, d_latent=shape_list[-1])
    assert enc.shape == (batch, shape_list[-1])
    assert recon.shape == (batch, shape_list[0])
    assert jnp.allclose(enc, enc_ref, atol=1e-5, rtol=1e-5)
    assert jnp.allclose(recon, recon_ref, atol=1e-5, rtol=1e-5)

    # ---- bfloat16 parameters (recommended production setting): loose check ----
    fused_bf16 = prepare_fused_params(params, param_dtype=jnp.bfloat16)
    enc_b, recon_b = _run_forward(x, fused_bf16, d_latent=shape_list[-1])
    assert enc_b.shape == (batch, shape_list[-1])
    assert recon_b.shape == (batch, shape_list[0])
    assert jnp.allclose(enc_b, enc_ref, atol=1e-1, rtol=1e-1)
    assert jnp.allclose(recon_b, recon_ref, atol=1e-1, rtol=1e-1)

    print("KERNEL_OK")
</pallas_src>

<mosaic_0001>
module attributes {stable_mosaic.version = 11 : i64} {
  func.func @_fused_ae_kernel(%arg0: i32, %arg1: memref<16x64xf32, #tpu.memory_space<vmem>>, %arg2: memref<64x32xf32, #tpu.memory_space<vmem>>, %arg3: memref<32x128xf32, #tpu.memory_space<vmem>>, %arg4: memref<1x32xf32, #tpu.memory_space<vmem>>, %arg5: memref<1x128xf32, #tpu.memory_space<vmem>>, %arg6: memref<128x32xf32, #tpu.memory_space<vmem>>, %arg7: memref<32x128xf32, #tpu.memory_space<vmem>>, %arg8: memref<1x32xf32, #tpu.memory_space<vmem>>, %arg9: memref<1x128xf32, #tpu.memory_space<vmem>>, %arg10: memref<16x128xf32, #tpu.memory_space<vmem>>, %arg11: memref<16x128xf32, #tpu.memory_space<vmem>>) attributes {dimension_semantics = [#tpu.dimension_semantics<parallel>], iteration_bounds = array<i64: 1>, scalar_prefetch = 0 : i64, scratch_operands = 0 : i64, tpu.core_type = #tpu.core_type<tc>, window_params = [{transform_indices = @transform_0, window_bounds = array<i64: 16, 64>}, {pipeline_mode = #tpu.pipeline_mode<synchronous>, transform_indices = @transform_1, window_bounds = array<i64: 64, 32>}, {pipeline_mode = #tpu.pipeline_mode<synchronous>, transform_indices = @transform_2, window_bounds = array<i64: 32, 128>}, {pipeline_mode = #tpu.pipeline_mode<synchronous>, transform_indices = @transform_3, window_bounds = array<i64: 1, 32>}, {pipeline_mode = #tpu.pipeline_mode<synchronous>, transform_indices = @transform_4, window_bounds = array<i64: 1, 128>}, {pipeline_mode = #tpu.pipeline_mode<synchronous>, transform_indices = @transform_5, window_bounds = array<i64: 128, 32>}, {pipeline_mode = #tpu.pipeline_mode<synchronous>, transform_indices = @transform_6, window_bounds = array<i64: 32, 128>}, {pipeline_mode = #tpu.pipeline_mode<synchronous>, transform_indices = @transform_7, window_bounds = array<i64: 1, 32>}, {pipeline_mode = #tpu.pipeline_mode<synchronous>, transform_indices = @transform_8, window_bounds = array<i64: 1, 128>}, {transform_indices = @transform_9, window_bounds = array<i64: 16, 128>}, {transform_indices = @transform_10, window_bounds = array<i64: 16, 128>}]} {
    %c0 = arith.constant 0 : index
    %c0_0 = arith.constant 0 : index
    %0 = vector.load %arg1[%c0, %c0_0] : memref<16x64xf32, #tpu.memory_space<vmem>>, vector<16x64xf32>
    %c0_1 = arith.constant 0 : index
    %c0_2 = arith.constant 0 : index
    %1 = vector.load %arg2[%c0_1, %c0_2] : memref<64x32xf32, #tpu.memory_space<vmem>>, vector<64x32xf32>
    %cst = arith.constant dense<0.000000e+00> : vector<16x32xf32>
    %2 = tpu.matmul %0, %1, %cst {dimension_numbers = #tpu.dot_dimension_numbers<[1], [0], [0], [1], [0, 0, 1, 1], [], []>} : vector<16x64xf32>, vector<64x32xf32>, vector<16x32xf32> -> vector<16x32xf32>
    %c0_3 = arith.constant 0 : index
    %c0_4 = arith.constant 0 : index
    %3 = vector.load %arg4[%c0_3, %c0_4] : memref<1x32xf32, #tpu.memory_space<vmem>>, vector<1x32xf32>
    %4 = vector.broadcast %3 : vector<1x32xf32> to vector<16x32xf32>
    %5 = arith.addf %2, %4 : vector<16x32xf32>
    %6 = arith.negf %5 : vector<16x32xf32>
    %7 = math.exp %6 : vector<16x32xf32>
    %cst_5 = arith.constant 1.000000e+00 : f32
    %8 = vector.broadcast %cst_5 : f32 to vector<16x32xf32>
    %9 = arith.addf %8, %7 : vector<16x32xf32>
    %10 = arith.divf %8, %9 : vector<16x32xf32>
    %11 = arith.mulf %5, %10 : vector<16x32xf32>
    %c0_6 = arith.constant 0 : index
    %c0_7 = arith.constant 0 : index
    %12 = vector.load %arg3[%c0_6, %c0_7] : memref<32x128xf32, #tpu.memory_space<vmem>>, vector<32x128xf32>
    %cst_8 = arith.constant dense<0.000000e+00> : vector<16x128xf32>
    %13 = tpu.matmul %11, %12, %cst_8 {dimension_numbers = #tpu.dot_dimension_numbers<[1], [0], [0], [1], [0, 0, 1, 1], [], []>} : vector<16x32xf32>, vector<32x128xf32>, vector<16x128xf32> -> vector<16x128xf32>
    %c0_9 = arith.constant 0 : index
    %c0_10 = arith.constant 0 : index
    %14 = vector.load %arg5[%c0_9, %c0_10] : memref<1x128xf32, #tpu.memory_space<vmem>>, vector<1x128xf32>
    %15 = vector.broadcast %14 : vector<1x128xf32> to vector<16x128xf32>
    %16 = arith.addf %13, %15 : vector<16x128xf32>
    %c0_11 = arith.constant 0 : index
    %c0_12 = arith.constant 0 : index
    %17 = vector.load %arg10[%c0_11, %c0_12] : memref<16x128xf32, #tpu.memory_space<vmem>>, vector<16x128xf32>
    tpu.vector_store %arg10[%c0_11, %c0_12], %16 {strides = array<i32>} : memref<16x128xf32, #tpu.memory_space<vmem>>, vector<16x128xf32>,
    %18 = arith.negf %16 : vector<16x128xf32>
    %19 = math.exp %18 : vector<16x128xf32>
    %cst_13 = arith.constant 1.000000e+00 : f32
    %20 = vector.broadcast %cst_13 : f32 to vector<16x128xf32>
    %21 = arith.addf %20, %19 : vector<16x128xf32>
    %22 = arith.divf %20, %21 : vector<16x128xf32>
    %23 = arith.mulf %16, %22 : vector<16x128xf32>
    %c0_14 = arith.constant 0 : index
    %c0_15 = arith.constant 0 : index
    %24 = vector.load %arg6[%c0_14, %c0_15] : memref<128x32xf32, #tpu.memory_space<vmem>>, vector<128x32xf32>
    %cst_16 = arith.constant dense<0.000000e+00> : vector<16x32xf32>
    %25 = tpu.matmul %23, %24, %cst_16 {dimension_numbers = #tpu.dot_dimension_numbers<[1], [0], [0], [1], [0, 0, 1, 1], [], []>} : vector<16x128xf32>, vector<128x32xf32>, vector<16x32xf32> -> vector<16x32xf32>
    %c0_17 = arith.constant 0 : index
    %c0_18 = arith.constant 0 : index
    %26 = vector.load %arg8[%c0_17, %c0_18] : memref<1x32xf32, #tpu.memory_space<vmem>>, vector<1x32xf32>
    %27 = vector.broadcast %26 : vector<1x32xf32> to vector<16x32xf32>
    %28 = arith.addf %25, %27 : vector<16x32xf32>
    %29 = arith.negf %28 : vector<16x32xf32>
    %30 = math.exp %29 : vector<16x32xf32>
    %cst_19 = arith.constant 1.000000e+00 : f32
    %31 = vector.broadcast %cst_19 : f32 to vector<16x32xf32>
    %32 = arith.addf %31, %30 : vector<16x32xf32>
    %33 = arith.divf %31, %32 : vector<16x32xf32>
    %34 = arith.mulf %28, %33 : vector<16x32xf32>
    %c0_20 = arith.constant 0 : index
    %c0_21 = arith.constant 0 : index
    %35 = vector.load %arg7[%c0_20, %c0_21] : memref<32x128xf32, #tpu.memory_space<vmem>>, vector<32x128xf32>
    %cst_22 = arith.constant dense<0.000000e+00> : vector<16x128xf32>
    %36 = tpu.matmul %34, %35, %cst_22 {dimension_numbers = #tpu.dot_dimension_numbers<[1], [0], [0], [1], [0, 0, 1, 1], [], []>} : vector<16x32xf32>, vector<32x128xf32>, vector<16x128xf32> -> vector<16x128xf32>
    %c0_23 = arith.constant 0 : index
    %c0_24 = arith.constant 0 : index
    %37 = vector.load %arg9[%c0_23, %c0_24] : memref<1x128xf32, #tpu.memory_space<vmem>>, vector<1x128xf32>
    %38 = vector.broadcast %37 : vector<1x128xf32> to vector<16x128xf32>
    %39 = arith.addf %36, %38 : vector<16x128xf32>
    %c0_25 = arith.constant 0 : index
    %c0_26 = arith.constant 0 : index
    %40 = vector.load %arg11[%c0_25, %c0_26] : memref<16x128xf32, #tpu.memory_space<vmem>>, vector<16x128xf32>
    tpu.vector_store %arg11[%c0_25, %c0_26], %39 {strides = array<i32>} : memref<16x128xf32, #tpu.memory_space<vmem>>, vector<16x128xf32>,
    return
  }
  func.func @transform_0(%arg0: i32) -> (i32, i32) {
    %c0_i32 = arith.constant 0 : i32
    %c0_i32_0 = arith.constant 0 : i32
    return %arg0, %c0_i32 : i32, i32
  }
  func.func @transform_1(%arg0: i32) -> (i32, i32) {
    %c0_i32 = arith.constant 0 : i32
    %c0_i32_0 = arith.constant 0 : i32
    %c0_i32_1 = arith.constant 0 : i32
    return %c0_i32, %c0_i32_0 : i32, i32
  }
  func.func @transform_2(%arg0: i32) -> (i32, i32) {
    %c0_i32 = arith.constant 0 : i32
    %c0_i32_0 = arith.constant 0 : i32
    %c0_i32_1 = arith.constant 0 : i32
    return %c0_i32, %c0_i32_0 : i32, i32
  }
  func.func @transform_3(%arg0: i32) -> (i32, i32) {
    %c0_i32 = arith.constant 0 : i32
    %c0_i32_0 = arith.constant 0 : i32
    %c0_i32_1 = arith.constant 0 : i32
    return %c0_i32, %c0_i32_0 : i32, i32
  }
  func.func @transform_4(%arg0: i32) -> (i32, i32) {
    %c0_i32 = arith.constant 0 : i32
    %c0_i32_0 = arith.constant 0 : i32
    %c0_i32_1 = arith.constant 0 : i32
    return %c0_i32, %c0_i32_0 : i32, i32
  }
  func.func @transform_5(%arg0: i32) -> (i32, i32) {
    %c0_i32 = arith.constant 0 : i32
    %c0_i32_0 = arith.constant 0 : i32
    %c0_i32_1 = arith.constant 0 : i32
    return %c0_i32, %c0_i32_0 : i32, i32
  }
  func.func @transform_6(%arg0: i32) -> (i32, i32) {
    %c0_i32 = arith.constant 0 : i32
    %c0_i32_0 = arith.constant 0 : i32
    %c0_i32_1 = arith.constant 0 : i32
    return %c0_i32, %c0_i32_0 : i32, i32
  }
  func.func @transform_7(%arg0: i32) -> (i32, i32) {
    %c0_i32 = arith.constant 0 : i32
    %c0_i32_0 = arith.constant 0 : i32
    %c0_i32_1 = arith.constant 0 : i32
    return %c0_i32, %c0_i32_0 : i32, i32
  }
  func.func @transform_8(%arg0: i32) -> (i32, i32) {
    %c0_i32 = arith.constant 0 : i32
    %c0_i32_0 = arith.constant 0 : i32
    %c0_i32_1 = arith.constant 0 : i32
    return %c0_i32, %c0_i32_0 : i32, i32
  }
  func.func @transform_9(%arg0: i32) -> (i32, i32) {
    %c0_i32 = arith.constant 0 : i32
    %c0_i32_0 = arith.constant 0 : i32
    return %arg0, %c0_i32 : i32, i32
  }
  func.func @transform_10(%arg0: i32) -> (i32, i32) {
    %c0_i32 = arith.constant 0 : i32
    %c0_i32_0 = arith.constant 0 : i32
    return %arg0, %c0_i32 : i32, i32
  }
}

module attributes {stable_mosaic.version = 11 : i64} {
  func.func @_fused_ae_kernel(%arg0: i32, %arg1: memref<16x64xf32, #tpu.memory_space<vmem>>, %arg2: memref<64x32xf32, #tpu.memory_space<vmem>>, %arg3: memref<32x128xf32, #tpu.memory_space<vmem>>, %arg4: memref<1x32xf32, #tpu.memory_space<vmem>>, %arg5: memref<1x128xf32, #tpu.memory_space<vmem>>, %arg6: memref<128x32xf32, #tpu.memory_space<vmem>>, %arg7: memref<32x128xf32, #tpu.memory_space<vmem>>, %arg8: memref<1x32xf32, #tpu.memory_space<vmem>>, %arg9: memref<1x128xf32, #tpu.memory_space<vmem>>, %arg10: memref<16x128xf32, #tpu.memory_space<vmem>>, %arg11: memref<16x128xf32, #tpu.memory_space<vmem>>) attributes {dimension_semantics = [#tpu.dimension_semantics<parallel>], iteration_bounds = array<i64: 1>, scalar_prefetch = 0 : i64, scratch_operands = 0 : i64, tpu.core_type = #tpu.core_type<tc>, window_params = [{transform_indices = @transform_0, window_bounds = array<i64: 16, 64>}, {pipeline_mode = #tpu.pipeline_mode<synchronous>, transform_indices = @transform_1, window_bounds = array<i64: 64, 32>}, {pipeline_mode = #tpu.pipeline_mode<synchronous>, transform_indices = @transform_2, window_bounds = array<i64: 32, 128>}, {pipeline_mode = #tpu.pipeline_mode<synchronous>, transform_indices = @transform_3, window_bounds = array<i64: 1, 32>}, {pipeline_mode = #tpu.pipeline_mode<synchronous>, transform_indices = @transform_4, window_bounds = array<i64: 1, 128>}, {pipeline_mode = #tpu.pipeline_mode<synchronous>, transform_indices = @transform_5, window_bounds = array<i64: 128, 32>}, {pipeline_mode = #tpu.pipeline_mode<synchronous>, transform_indices = @transform_6, window_bounds = array<i64: 32, 128>}, {pipeline_mode = #tpu.pipeline_mode<synchronous>, transform_indices = @transform_7, window_bounds = array<i64: 1, 32>}, {pipeline_mode = #tpu.pipeline_mode<synchronous>, transform_indices = @transform_8, window_bounds = array<i64: 1, 128>}, {transform_indices = @transform_9, window_bounds = array<i64: 16, 128>}, {transform_indices = @transform_10, window_bounds = array<i64: 16, 128>}]} {
    %c0 = arith.constant 0 : index
    %c0_0 = arith.constant 0 : index
    %0 = vector.load %arg1[%c0, %c0_0] : memref<16x64xf32, #tpu.memory_space<vmem>>, vector<16x64xf32>
    %c0_1 = arith.constant 0 : index
    %c0_2 = arith.constant 0 : index
    %1 = vector.load %arg2[%c0_1, %c0_2] : memref<64x32xf32, #tpu.memory_space<vmem>>, vector<64x32xf32>
    %cst = arith.constant dense<0.000000e+00> : vector<16x32xf32>
    %2 = tpu.matmul %0, %1, %cst {dimension_numbers = #tpu.dot_dimension_numbers<[1], [0], [0], [1], [0, 0, 1, 1], [], []>} : vector<16x64xf32>, vector<64x32xf32>, vector<16x32xf32> -> vector<16x32xf32>
    %c0_3 = arith.constant 0 : index
    %c0_4 = arith.constant 0 : index
    %3 = vector.load %arg4[%c0_3, %c0_4] : memref<1x32xf32, #tpu.memory_space<vmem>>, vector<1x32xf32>
    %4 = vector.broadcast %3 : vector<1x32xf32> to vector<16x32xf32>
    %5 = arith.addf %2, %4 : vector<16x32xf32>
    %6 = arith.negf %5 : vector<16x32xf32>
    %7 = math.exp %6 : vector<16x32xf32>
    %cst_5 = arith.constant 1.000000e+00 : f32
    %8 = vector.broadcast %cst_5 : f32 to vector<16x32xf32>
    %9 = arith.addf %8, %7 : vector<16x32xf32>
    %10 = arith.divf %8, %9 : vector<16x32xf32>
    %11 = arith.mulf %5, %10 : vector<16x32xf32>
    %c0_6 = arith.constant 0 : index
    %c0_7 = arith.constant 0 : index
    %12 = vector.load %arg3[%c0_6, %c0_7] : memref<32x128xf32, #tpu.memory_space<vmem>>, vector<32x128xf32>
    %cst_8 = arith.constant dense<0.000000e+00> : vector<16x128xf32>
    %13 = tpu.matmul %11, %12, %cst_8 {dimension_numbers = #tpu.dot_dimension_numbers<[1], [0], [0], [1], [0, 0, 1, 1], [], []>} : vector<16x32xf32>, vector<32x128xf32>, vector<16x128xf32> -> vector<16x128xf32>
    %c0_9 = arith.constant 0 : index
    %c0_10 = arith.constant 0 : index
    %14 = vector.load %arg5[%c0_9, %c0_10] : memref<1x128xf32, #tpu.memory_space<vmem>>, vector<1x128xf32>
    %15 = vector.broadcast %14 : vector<1x128xf32> to vector<16x128xf32>
    %16 = arith.addf %13, %15 : vector<16x128xf32>
    %c0_11 = arith.constant 0 : index
    %c0_12 = arith.constant 0 : index
    %17 = vector.load %arg10[%c0_11, %c0_12] : memref<16x128xf32, #tpu.memory_space<vmem>>, vector<16x128xf32>
    tpu.vector_store %arg10[%c0_11, %c0_12], %16 {strides = array<i32>} : memref<16x128xf32, #tpu.memory_space<vmem>>, vector<16x128xf32>,
    %18 = arith.negf %16 : vector<16x128xf32>
    %19 = math.exp %18 : vector<16x128xf32>
    %cst_13 = arith.constant 1.000000e+00 : f32
    %20 = vector.broadcast %cst_13 : f32 to vector<16x128xf32>
    %21 = arith.addf %20, %19 : vector<16x128xf32>
    %22 = arith.divf %20, %21 : vector<16x128xf32>
    %23 = arith.mulf %16, %22 : vector<16x128xf32>
    %c0_14 = arith.constant 0 : index
    %c0_15 = arith.constant 0 : index
    %24 = vector.load %arg6[%c0_14, %c0_15] : memref<128x32xf32, #tpu.memory_space<vmem>>, vector<128x32xf32>
    %cst_16 = arith.constant dense<0.000000e+00> : vector<16x32xf32>
    %25 = tpu.matmul %23, %24, %cst_16 {dimension_numbers = #tpu.dot_dimension_numbers<[1], [0], [0], [1], [0, 0, 1, 1], [], []>} : vector<16x128xf32>, vector<128x32xf32>, vector<16x32xf32> -> vector<16x32xf32>
    %c0_17 = arith.constant 0 : index
    %c0_18 = arith.constant 0 : index
    %26 = vector.load %arg8[%c0_17, %c0_18] : memref<1x32xf32, #tpu.memory_space<vmem>>, vector<1x32xf32>
    %27 = vector.broadcast %26 : vector<1x32xf32> to vector<16x32xf32>
    %28 = arith.addf %25, %27 : vector<16x32xf32>
    %29 = arith.negf %28 : vector<16x32xf32>
    %30 = math.exp %29 : vector<16x32xf32>
    %cst_19 = arith.constant 1.000000e+00 : f32
    %31 = vector.broadcast %cst_19 : f32 to vector<16x32xf32>
    %32 = arith.addf %31, %30 : vector<16x32xf32>
    %33 = arith.divf %31, %32 : vector<16x32xf32>
    %34 = arith.mulf %28, %33 : vector<16x32xf32>
    %c0_20 = arith.constant 0 : index
    %c0_21 = arith.constant 0 : index
    %35 = vector.load %arg7[%c0_20, %c0_21] : memref<32x128xf32, #tpu.memory_space<vmem>>, vector<32x128xf32>
    %cst_22 = arith.constant dense<0.000000e+00> : vector<16x128xf32>
    %36 = tpu.matmul %34, %35, %cst_22 {dimension_numbers = #tpu.dot_dimension_numbers<[1], [0], [0], [1], [0, 0, 1, 1], [], []>} : vector<16x32xf32>, vector<32x128xf32>, vector<16x128xf32> -> vector<16x128xf32>
    %c0_23 = arith.constant 0 : index
    %c0_24 = arith.constant 0 : index
    %37 = vector.load %arg9[%c0_23, %c0_24] : memref<1x128xf32, #tpu.memory_space<vmem>>, vector<1x128xf32>
    %38 = vector.broadcast %37 : vector<1x128xf32> to vector<16x128xf32>
    %39 = arith.addf %36, %38 : vector<16x128xf32>
    %c0_25 = arith.constant 0 : index
    %c0_26 = arith.constant 0 : index
    %40 = vector.load %arg11[%c0_25, %c0_26] : memref<16x128xf32, #tpu.memory_space<vmem>>, vector<16x128xf32>
    tpu.vector_store %arg11[%c0_25, %c0_26], %39 {strides = array<i32>} : memref<16x128xf32, #tpu.memory_space<vmem>>, vector<16x128xf32>,
    return
  }
  func.func @transform_0(%arg0: i32) -> (i32, i32) {
    %c0_i32 = arith.constant 0 : i32
    %c0_i32_0 = arith.constant 0 : i32
    return %arg0, %c0_i32 : i32, i32
  }
  func.func @transform_1(%arg0: i32) -> (i32, i32) {
    %c0_i32 = arith.constant 0 : i32
    %c0_i32_0 = arith.constant 0 : i32
    %c0_i32_1 = arith.constant 0 : i32
    return %c0_i32, %c0_i32_0 : i32, i32
  }
  func.func @transform_2(%arg0: i32) -> (i32, i32) {
    %c0_i32 = arith.constant 0 : i32
    %c0_i32_0 = arith.constant 0 : i32
    %c0_i32_1 = arith.constant 0 : i32
    return %c0_i32, %c0_i32_0 : i32, i32
  }
  func.func @transform_3(%arg0: i32) -> (i32, i32) {
    %c0_i32 = arith.constant 0 : i32
    %c0_i32_0 = arith.constant 0 : i32
    %c0_i32_1 = arith.constant 0 : i32
    return %c0_i32, %c0_i32_0 : i32, i32
  }
  func.func @transform_4(%arg0: i32) -> (i32, i32) {
    %c0_i32 = arith.constant 0 : i32
    %c0_i32_0 = arith.constant 0 : i32
    %c0_i32_1 = arith.constant 0 : i32
    return %c0_i32, %c0_i32_0 : i32, i32
  }
  func.func @transform_5(%arg0: i32) -> (i32, i32) {
    %c0_i32 = arith.constant 0 : i32
    %c0_i32_0 = arith.constant 0 : i32
    %c0_i32_1 = arith.constant 0 : i32
    return %c0_i32, %c0_i32_0 : i32, i32
  }
  func.func @transform_6(%arg0: i32) -> (i32, i32) {
    %c0_i32 = arith.constant 0 : i32
    %c0_i32_0 = arith.constant 0 : i32
    %c0_i32_1 = arith.constant 0 : i32
    return %c0_i32, %c0_i32_0 : i32, i32
  }
  func.func @transform_7(%arg0: i32) -> (i32, i32) {
    %c0_i32 = arith.constant 0 : i32
    %c0_i32_0 = arith.constant 0 : i32
    %c0_i32_1 = arith.constant 0 : i32
    return %c0_i32, %c0_i32_0 : i32, i32
  }
  func.func @transform_8(%arg0: i32) -> (i32, i32) {
    %c0_i32 = arith.constant 0 : i32
    %c0_i32_0 = arith.constant 0 : i32
    %c0_i32_1 = arith.constant 0 : i32
    return %c0_i32, %c0_i32_0 : i32, i32
  }
  func.func @transform_9(%arg0: i32) -> (i32, i32) {
    %c0_i32 = arith.constant 0 : i32
    %c0_i32_0 = arith.constant 0 : i32
    return %arg0, %c0_i32 : i32, i32
  }
  func.func @transform_10(%arg0: i32) -> (i32, i32) {
    %c0_i32 = arith.constant 0 : i32
    %c0_i32_0 = arith.constant 0 : i32
    return %arg0, %c0_i32 : i32, i32
  }
}

</mosaic_0001>

<llo_original>
// kernel: tied_autoencoder_forward_fused.1
$region0: #{tied_autoencoder_forward_fused.1}
  #allocation0 [shape = 'u32[]', space=smem, size = 0x4, offset = 0x4, fixed_abs, tag = 'smem constant byte address 0x4 - core index']
  #allocation1 [shape = 'u32[72,128]{1,0:T(1,128)}', space=vmem, size = 0x9000, scoped, tag = 'internal scratch']
  %s0 = inlined_call_operand.vmem [shape: f32[16,64], index: 0, kind: input, shape index: {}]
  %s1 = inlined_call_operand.vmem [shape: f32[64,32], index: 1, kind: input, shape index: {}]
  %s2 = inlined_call_operand.vmem [shape: f32[32,128], index: 2, kind: input, shape index: {}]
  %s3 = inlined_call_operand.vmem [shape: f32[1,32], index: 3, kind: input, shape index: {}]
  %s4 = inlined_call_operand.vmem [shape: f32[1,128], index: 4, kind: input, shape index: {}]
  %s5 = inlined_call_operand.vmem [shape: f32[128,32], index: 5, kind: input, shape index: {}]
  %s6 = inlined_call_operand.vmem [shape: f32[32,128], index: 6, kind: input, shape index: {}]
  %s7 = inlined_call_operand.vmem [shape: f32[1,32], index: 7, kind: input, shape index: {}]
  %s8 = inlined_call_operand.vmem [shape: f32[1,128], index: 8, kind: input, shape index: {}]
  %s9 = inlined_call_operand.vmem [shape: f32[16,128], index: 9, kind: output, shape index: {0}]
  %s10 = inlined_call_operand.vmem [shape: f32[16,128], index: 10, kind: output, shape index: {1}]
  %11 = xla_tuple %s9, %s10
  %s12 = sld [smem:[#allocation0]]
  $region54: #{tied_autoencoder_forward_fused.1} parent=0
    _
  %s14 = ssub.s32 1, %s12
  %s15 = scalar_select 0, %s14, %s12
  // Predicated region
  $region2: #{tied_autoencoder_forward_fused.1} parent=0 // pred_check
    _
  $region3: #{tied_autoencoder_forward_fused.1} parent=0 // pred_check_branch
    %17 = sbr.rel (0) target = $region5
  $region4: #{tied_autoencoder_forward_fused.1} parent=0 // pred_region
    _
  $region5: #{tied_autoencoder_forward_fused.1} parent=0 // pred_fallthru
    _
  // Predicated region
  $region6: #{tied_autoencoder_forward_fused.1} parent=0 // pred_check
    _
  $region7: #{tied_autoencoder_forward_fused.1} parent=0 // pred_check_branch
    %19 = sbr.rel (0) target = $region9
  $region8: #{tied_autoencoder_forward_fused.1} parent=0 // pred_region
    _
  $region9: #{tied_autoencoder_forward_fused.1} parent=0 // pred_fallthru
    _
  // Predicated region
  $region10: #{tied_autoencoder_forward_fused.1} parent=0 // pred_check
    _
  $region11: #{tied_autoencoder_forward_fused.1} parent=0 // pred_check_branch
    %21 = sbr.rel (0) target = $region13
  $region12: #{tied_autoencoder_forward_fused.1} parent=0 // pred_region
    _
  $region13: #{tied_autoencoder_forward_fused.1} parent=0 // pred_fallthru
    _
  // Predicated region
  $region14: #{tied_autoencoder_forward_fused.1} parent=0 // pred_check
    _
  $region15: #{tied_autoencoder_forward_fused.1} parent=0 // pred_check_branch
    %23 = sbr.rel (0) target = $region17
  $region16: #{tied_autoencoder_forward_fused.1} parent=0 // pred_region
    _
  $region17: #{tied_autoencoder_forward_fused.1} parent=0 // pred_fallthru
    _
  // Predicated region
  $region18: #{tied_autoencoder_forward_fused.1} parent=0 // pred_check
    _
  $region19: #{tied_autoencoder_forward_fused.1} parent=0 // pred_check_branch
    %25 = sbr.rel (0) target = $region21
  $region20: #{tied_autoencoder_forward_fused.1} parent=0 // pred_region
    _
  $region21: #{tied_autoencoder_forward_fused.1} parent=0 // pred_fallthru
    _
  // Predicated region
  $region22: #{tied_autoencoder_forward_fused.1} parent=0 // pred_check
    _
  $region23: #{tied_autoencoder_forward_fused.1} parent=0 // pred_check_branch
    %27 = sbr.rel (0) target = $region25
  $region24: #{tied_autoencoder_forward_fused.1} parent=0 // pred_region
    _
  $region25: #{tied_autoencoder_forward_fused.1} parent=0 // pred_fallthru
    _
  // Predicated region
  $region26: #{tied_autoencoder_forward_fused.1} parent=0 // pred_check
    _
  $region27: #{tied_autoencoder_forward_fused.1} parent=0 // pred_check_branch
    %29 = sbr.rel (0) target = $region29
  $region28: #{tied_autoencoder_forward_fused.1} parent=0 // pred_region
    _
  $region29: #{tied_autoencoder_forward_fused.1} parent=0 // pred_fallthru
    _
  // Predicated region
  $region30: #{tied_autoencoder_forward_fused.1} parent=0 // pred_check
    _
  $region31: #{tied_autoencoder_forward_fused.1} parent=0 // pred_check_branch
    %31 = sbr.rel (0) target = $region33
  $region32: #{tied_autoencoder_forward_fused.1} parent=0 // pred_region
    _
  $region33: #{tied_autoencoder_forward_fused.1} parent=0 // pred_fallthru
    _
  // Predicated region
  $region34: #{tied_autoencoder_forward_fused.1} parent=0 // pred_check
    _
  $region35: #{tied_autoencoder_forward_fused.1} parent=0 // pred_check_branch
    %33 = sbr.rel (0) target = $region37
  $region36: #{tied_autoencoder_forward_fused.1} parent=0 // pred_region
    _
  $region37: #{tied_autoencoder_forward_fused.1} parent=0 // pred_fallthru
    _
  %v34 = vld [vmem:[%s0] sm:$0xff]
  %v35 = vld [vmem:[%s0 + $0x8] sm:$0xff]
  %v36 = vld [vmem:[%s1] sm:$0xff]
  %v37 = vld [vmem:[%s1 + $0x8] sm:$0xff]
  %v38 = vld [vmem:[%s1 + $0x10] sm:$0xff]
  %v39 = vld [vmem:[%s1 + $0x18] sm:$0xff]
  %v40 = vld [vmem:[%s1 + $0x20] sm:$0xff]
  %v41 = vld [vmem:[%s1 + $0x28] sm:$0xff]
  %v42 = vld [vmem:[%s1 + $0x30] sm:$0xff]
  %v43 = vld [vmem:[%s1 + $0x38] sm:$0xff]
  %v44 = vld [vmem:[%s3] sm:$0x1]
  %v46 = vperm.slane %v44, 0
  %vm48 = vcmask 523264
  %v50 = vsel %vm48, %v34, 0
  %v53 = vsel %vm48, %v35, 0
  %55 = vmatpush.msra.mxu0 0.0
  %56 = vmatpush.msra.mxu0 0.0
  %57 = vmatpush.msra.mxu0 0.0
  %58 = vmatpush.msra.mxu0 0.0
  %59 = vmatpush.msra.mxu0 0.0
  %60 = vmatpush.msra.mxu0 0.0
  %61 = vmatpush.msra.mxu0 0.0
  %62 = vmatpush.msra.mxu0 0.0
  %63 = vmatpush.msra.mxu0 %v43
  %64 = vmatpush.msra.mxu0 %v42
  %65 = vmatpush.msra.mxu0 %v41
  %66 = vmatpush.msra.mxu0 %v40
  %67 = vmatpush.msra.mxu0 %v39
  %68 = vmatpush.msra.mxu0 %v38
  %69 = vmatpush.msra.mxu0 %v37
  %70 = vmatpush.msra.mxu0 %v36
  %71 = vmatmul.f32.gmra.mxu0 %v50
  %v72 = vpop.f32.mrf.mxu0
  %v73 = vadd.f32 %v46, %v72
  %74 = vmatmul.f32.gmra.mxu0 %v53
  %v75 = vpop.f32.mrf.mxu0
  %v76 = vadd.f32 %v46, %v75
  %77 = vdwg.mxu0
  %v78 = vxor.u32 %v73, 2147483648
  %v79 = vxor.u32 %v76, 2147483648
  %v80 = vmul.f32 %v78, 1.442695
  %v81 = vpow.pop %v80
  %v82 = vmul.f32 %v79, 1.442695
  %v83 = vpow.pop %v82
  %v84 = vadd.f32 %v81, 1.0
  %v85 = vadd.f32 %v83, 1.0
  %v86 = vrcp.pop %v84
  %v87 = vmul.f32 %v84, %v86
  %v88 = vsub.f32 1.0, %v87
  %v89 = vmul.f32 %v86, %v88
  %v90 = vadd.f32 %v86, %v89
  %vm91 = vweird.f32 %v84
  %vm92 = vweird.f32 %v86
  %vm93 = vmor %vm91, %vm92
  %v94 = vsel %vm93, %v86, %v90
  %v95 = vand.u32 2147483647, %v84
  %vm96 = vcmp.eq.f32.partialorder %v95, 8.507059e+37
  %v97 = vand.u32 %v84, 2147483648
  %v98 = vor.u32 1.1754944e-38, %v97
  %v99 = vsel %vm96, %v98, %v94
  %v100 = vmul.f32 1.0, %v99
  %v101 = vrcp.pop %v85
  %v102 = vmul.f32 %v85, %v101
  %v103 = vsub.f32 1.0, %v102
  %v104 = vmul.f32 %v101, %v103
  %v105 = vadd.f32 %v101, %v104
  %vm106 = vweird.f32 %v85
  %vm107 = vweird.f32 %v101
  %vm108 = vmor %vm106, %vm107
  %v109 = vsel %vm108, %v101, %v105
  %v110 = vand.u32 2147483647, %v85
  %vm111 = vcmp.eq.f32.partialorder %v110, 8.507059e+37
  %v112 = vand.u32 %v85, 2147483648
  %v113 = vor.u32 1.1754944e-38, %v112
  %v114 = vsel %vm111, %v113, %v109
  %v115 = vmul.f32 1.0, %v114
  %v116 = vmul.f32 %v73, %v100
  %v117 = vmul.f32 %v76, %v115
  %v118 = vld [vmem:[%s2] sm:$0xff]
  %v119 = vld [vmem:[%s2 + $0x8] sm:$0xff]
  %v120 = vld [vmem:[%s2 + $0x10] sm:$0xff]
  %v121 = vld [vmem:[%s2 + $0x18] sm:$0xff]
  %v122 = vld [vmem:[%s4] sm:$0x1]
  %v124 = vperm.slane %v122, 0
  %vm126 = vcmask 261120
  %v128 = vsel %vm126, %v116, 0
  %v131 = vsel %vm126, %v117, 0
  %133 = vmatpush.msra.mxu0 0.0
  %134 = vmatpush.msra.mxu0 0.0
  %135 = vmatpush.msra.mxu0 0.0
  %136 = vmatpush.msra.mxu0 0.0
  %137 = vmatpush.msra.mxu0 0.0
  %138 = vmatpush.msra.mxu0 0.0
  %139 = vmatpush.msra.mxu0 0.0
  %140 = vmatpush.msra.mxu0 0.0
  %141 = vmatpush.msra.mxu0 0.0
  %142 = vmatpush.msra.mxu0 0.0
  %143 = vmatpush.msra.mxu0 0.0
  %144 = vmatpush.msra.mxu0 0.0
  %145 = vmatpush.msra.mxu0 %v121
  %146 = vmatpush.msra.mxu0 %v120
  %147 = vmatpush.msra.mxu0 %v119
  %148 = vmatpush.msra.mxu0 %v118
  %149 = vmatmul.f32.gmra.mxu0 %v128
  %v150 = vpop.f32.mrf.mxu0
  %v151 = vadd.f32 %v124, %v150
  %152 = vmatmul.f32.gmra.mxu0 %v131
  %v153 = vpop.f32.mrf.mxu0
  %v154 = vadd.f32 %v124, %v153
  %155 = vdwg.mxu0
  %156 = vst [vmem:[%s9] sm:$0xff] %v151
  %157 = vst [vmem:[%s9 + $0x8] sm:$0xff] %v154
  %v158 = vxor.u32 %v151, 2147483648
  %v159 = vxor.u32 %v154, 2147483648
  %v160 = vmul.f32 %v158, 1.442695
  %v161 = vpow.pop %v160
  %v162 = vmul.f32 %v159, 1.442695
  %v163 = vpow.pop %v162
  %v164 = vadd.f32 %v161, 1.0
  %v165 = vadd.f32 %v163, 1.0
  %v166 = vrcp.pop %v164
  %v167 = vmul.f32 %v164, %v166
  %v168 = vsub.f32 1.0, %v167
  %v169 = vmul.f32 %v166, %v168
  %v170 = vadd.f32 %v166, %v169
  %vm171 = vweird.f32 %v164
  %vm172 = vweird.f32 %v166
  %vm173 = vmor %vm171, %vm172
  %v174 = vsel %vm173, %v166, %v170
  %v175 = vand.u32 2147483647, %v164
  %vm176 = vcmp.eq.f32.partialorder %v175, 8.507059e+37
  %v177 = vand.u32 %v164, 2147483648
  %v178 = vor.u32 1.1754944e-38, %v177
  %v179 = vsel %vm176, %v178, %v174
  %v180 = vmul.f32 1.0, %v179
  %v181 = vrcp.pop %v165
  %v182 = vmul.f32 %v165, %v181
  %v183 = vsub.f32 1.0, %v182
  %v184 = vmul.f32 %v181, %v183
  %v185 = vadd.f32 %v181, %v184
  %vm186 = vweird.f32 %v165
  %vm187 = vweird.f32 %v181
  %vm188 = vmor %vm186, %vm187
  %v189 = vsel %vm188, %v181, %v185
  %v190 = vand.u32 2147483647, %v165
  %vm191 = vcmp.eq.f32.partialorder %v190, 8.507059e+37
  %v192 = vand.u32 %v165, 2147483648
  %v193 = vor.u32 1.1754944e-38, %v192
  %v194 = vsel %vm191, %v193, %v189
  %v195 = vmul.f32 1.0, %v194
  %v196 = vmul.f32 %v151, %v180
  %v197 = vmul.f32 %v154, %v195
  %v198 = vld [vmem:[%s5] sm:$0xff]
  %v199 = vld [vmem:[%s5 + $0x8] sm:$0xff]
  %v200 = vld [vmem:[%s5 + $0x10] sm:$0xff]
  %v201 = vld [vmem:[%s5 + $0x18] sm:$0xff]
  %v202 = vld [vmem:[%s5 + $0x20] sm:$0xff]
  %v203 = vld [vmem:[%s5 + $0x28] sm:$0xff]
  %v204 = vld [vmem:[%s5 + $0x30] sm:$0xff]
  %v205 = vld [vmem:[%s5 + $0x38] sm:$0xff]
  %v206 = vld [vmem:[%s5 + $0x40] sm:$0xff]
  %v207 = vld [vmem:[%s5 + $0x48] sm:$0xff]
  %v208 = vld [vmem:[%s5 + $0x50] sm:$0xff]
  %v209 = vld [vmem:[%s5 + $0x58] sm:$0xff]
  %v210 = vld [vmem:[%s5 + $0x60] sm:$0xff]
  %v211 = vld [vmem:[%s5 + $0x68] sm:$0xff]
  %v212 = vld [vmem:[%s5 + $0x70] sm:$0xff]
  %v213 = vld [vmem:[%s5 + $0x78] sm:$0xff]
  %v214 = vld [vmem:[%s7] sm:$0x1]
  %v216 = vperm.slane %v214, 0
  %218 = vmatpush.msra.mxu0 %v213
  %219 = vmatpush.msra.mxu0 %v212
  %220 = vmatpush.msra.mxu0 %v211
  %221 = vmatpush.msra.mxu0 %v210
  %222 = vmatpush.msra.mxu0 %v209
  %223 = vmatpush.msra.mxu0 %v208
  %224 = vmatpush.msra.mxu0 %v207
  %225 = vmatpush.msra.mxu0 %v206
  %226 = vmatpush.msra.mxu0 %v205
  %227 = vmatpush.msra.mxu0 %v204
  %228 = vmatpush.msra.mxu0 %v203
  %229 = vmatpush.msra.mxu0 %v202
  %230 = vmatpush.msra.mxu0 %v201
  %231 = vmatpush.msra.mxu0 %v200
  %232 = vmatpush.msra.mxu0 %v199
  %233 = vmatpush.msra.mxu0 %v198
  %234 = vmatmul.f32.gmra.mxu0 %v196
  %v235 = vpop.f32.mrf.mxu0
  %v236 = vadd.f32 %v216, %v235
  %237 = vmatmul.f32.gmra.mxu0 %v197
  %v238 = vpop.f32.mrf.mxu0
  %v239 = vadd.f32 %v216, %v238
  %240 = vdwg.mxu0
  %v241 = vxor.u32 %v236, 2147483648
  %v242 = vxor.u32 %v239, 2147483648
  %v243 = vmul.f32 %v241, 1.442695
  %v244 = vpow.pop %v243
  %v245 = vmul.f32 %v242, 1.442695
  %v246 = vpow.pop %v245
  %v247 = vadd.f32 %v244, 1.0
  %v248 = vadd.f32 %v246, 1.0
  %v249 = vrcp.pop %v247
  %v250 = vmul.f32 %v247, %v249
  %v251 = vsub.f32 1.0, %v250
  %v252 = vmul.f32 %v249, %v251
  %v253 = vadd.f32 %v249, %v252
  %vm254 = vweird.f32 %v247
  %vm255 = vweird.f32 %v249
  %vm256 = vmor %vm254, %vm255
  %v257 = vsel %vm256, %v249, %v253
  %v258 = vand.u32 2147483647, %v247
  %vm259 = vcmp.eq.f32.partialorder %v258, 8.507059e+37
  %v260 = vand.u32 %v247, 2147483648
  %v261 = vor.u32 1.1754944e-38, %v260
  %v262 = vsel %vm259, %v261, %v257
  %v263 = vmul.f32 1.0, %v262
  %v264 = vrcp.pop %v248
  %v265 = vmul.f32 %v248, %v264
  %v266 = vsub.f32 1.0, %v265
  %v267 = vmul.f32 %v264, %v266
  %v268 = vadd.f32 %v264, %v267
  %vm269 = vweird.f32 %v248
  %vm270 = vweird.f32 %v264
  %vm271 = vmor %vm269, %vm270
  %v272 = vsel %vm271, %v264, %v268
  %v273 = vand.u32 2147483647, %v248
  %vm274 = vcmp.eq.f32.partialorder %v273, 8.507059e+37
  %v275 = vand.u32 %v248, 2147483648
  %v276 = vor.u32 1.1754944e-38, %v275
  %v277 = vsel %vm274, %v276, %v272
  %v278 = vmul.f32 1.0, %v277
  %v279 = vmul.f32 %v236, %v263
  %v280 = vmul.f32 %v239, %v278
  %v281 = vld [vmem:[%s6] sm:$0xff]
  %v282 = vld [vmem:[%s6 + $0x8] sm:$0xff]
  %v283 = vld [vmem:[%s6 + $0x10] sm:$0xff]
  %v284 = vld [vmem:[%s6 + $0x18] sm:$0xff]
  %v285 = vld [vmem:[%s8] sm:$0x1]
  %v287 = vperm.slane %v285, 0
  %v290 = vsel %vm126, %v279, 0
  %v293 = vsel %vm126, %v280, 0
  %295 = vmatpush.msra.mxu0 0.0
  %296 = vmatpush.msra.mxu0 0.0
  %297 = vmatpush.msra.mxu0 0.0
  %298 = vmatpush.msra.mxu0 0.0
  %299 = vmatpush.msra.mxu0 0.0
  %300 = vmatpush.msra.mxu0 0.0
  %301 = vmatpush.msra.mxu0 0.0
  %302 = vmatpush.msra.mxu0 0.0
  %303 = vmatpush.msra.mxu0 0.0
  %304 = vmatpush.msra.mxu0 0.0
  %305 = vmatpush.msra.mxu0 0.0
  %306 = vmatpush.msra.mxu0 0.0
  %307 = vmatpush.msra.mxu0 %v284
  %308 = vmatpush.msra.mxu0 %v283
  %309 = vmatpush.msra.mxu0 %v282
  %310 = vmatpush.msra.mxu0 %v281
  %311 = vmatmul.f32.gmra.mxu0 %v290
  %v312 = vpop.f32.mrf.mxu0
  %v313 = vadd.f32 %v287, %v312
  %314 = vmatmul.f32.gmra.mxu0 %v293
  %v315 = vpop.f32.mrf.mxu0
  %v316 = vadd.f32 %v287, %v315
  %317 = vdwg.mxu0
  %318 = vst [vmem:[%s10] sm:$0xff] %v313
  %319 = vst [vmem:[%s10 + $0x8] sm:$0xff] %v316
  // Predicated region
  $region38: #{tied_autoencoder_forward_fused.1} parent=0 // pred_check
    _
  $region39: #{tied_autoencoder_forward_fused.1} parent=0 // pred_check_branch
    %321 = sbr.rel (0) target = $region41
  $region40: #{tied_autoencoder_forward_fused.1} parent=0 // pred_region
    _
  $region41: #{tied_autoencoder_forward_fused.1} parent=0 // pred_fallthru
    _
  // Predicated region
  $region42: #{tied_autoencoder_forward_fused.1} parent=0 // pred_check
    _
  $region43: #{tied_autoencoder_forward_fused.1} parent=0 // pred_check_branch
    %323 = sbr.rel (0) target = $region45
  $region44: #{tied_autoencoder_forward_fused.1} parent=0 // pred_region
    _
  $region45: #{tied_autoencoder_forward_fused.1} parent=0 // pred_fallthru
    _
  // Predicated region
  $region46: #{tied_autoencoder_forward_fused.1} parent=0 // pred_check
    _
  $region47: #{tied_autoencoder_forward_fused.1} parent=0 // pred_check_branch
    %325 = sbr.rel (0) target = $region49
  $region48: #{tied_autoencoder_forward_fused.1} parent=0 // pred_region
    _
  $region49: #{tied_autoencoder_forward_fused.1} parent=0 // pred_fallthru
    _
  // Predicated region
  $region50: #{tied_autoencoder_forward_fused.1} parent=0 // pred_check
    _
  $region51: #{tied_autoencoder_forward_fused.1} parent=0 // pred_check_branch
    %327 = sbr.rel (0) target = $region53
  $region52: #{tied_autoencoder_forward_fused.1} parent=0 // pred_region
    _
  $region53: #{tied_autoencoder_forward_fused.1} parent=0 // pred_fallthru
    _

// kernel: tied_autoencoder_forward_fused.1
$region0: #{tied_autoencoder_forward_fused.1}
  #allocation0 [shape = 'u32[]', space=smem, size = 0x4, offset = 0x4, fixed_abs, tag = 'smem constant byte address 0x4 - core index']
  #allocation1 [shape = 'u32[72,128]{1,0:T(1,128)}', space=vmem, size = 0x9000, scoped, tag = 'internal scratch']
  %s0 = inlined_call_operand.vmem [shape: f32[16,64], index: 0, kind: input, shape index: {}]
  %s1 = inlined_call_operand.vmem [shape: f32[64,32], index: 1, kind: input, shape index: {}]
  %s2 = inlined_call_operand.vmem [shape: f32[32,128], index: 2, kind: input, shape index: {}]
  %s3 = inlined_call_operand.vmem [shape: f32[1,32], index: 3, kind: input, shape index: {}]
  %s4 = inlined_call_operand.vmem [shape: f32[1,128], index: 4, kind: input, shape index: {}]
  %s5 = inlined_call_operand.vmem [shape: f32[128,32], index: 5, kind: input, shape index: {}]
  %s6 = inlined_call_operand.vmem [shape: f32[32,128], index: 6, kind: input, shape index: {}]
  %s7 = inlined_call_operand.vmem [shape: f32[1,32], index: 7, kind: input, shape index: {}]
  %s8 = inlined_call_operand.vmem [shape: f32[1,128], index: 8, kind: input, shape index: {}]
  %s9 = inlined_call_operand.vmem [shape: f32[16,128], index: 9, kind: output, shape index: {0}]
  %s10 = inlined_call_operand.vmem [shape: f32[16,128], index: 10, kind: output, shape index: {1}]
  %11 = xla_tuple %s9, %s10
  %s12 = sld [smem:[#allocation0]]
  $region54: #{tied_autoencoder_forward_fused.1} parent=0
    _
  %s14 = ssub.s32 1, %s12
  %s15 = scalar_select 0, %s14, %s12
  // Predicated region
  $region2: #{tied_autoencoder_forward_fused.1} parent=0 // pred_check
    _
  $region3: #{tied_autoencoder_forward_fused.1} parent=0 // pred_check_branch
    %17 = sbr.rel (0) target = $region5
  $region4: #{tied_autoencoder_forward_fused.1} parent=0 // pred_region
    _
  $region5: #{tied_autoencoder_forward_fused.1} parent=0 // pred_fallthru
    _
  // Predicated region
  $region6: #{tied_autoencoder_forward_fused.1} parent=0 // pred_check
    _
  $region7: #{tied_autoencoder_forward_fused.1} parent=0 // pred_check_branch
    %19 = sbr.rel (0) target = $region9
  $region8: #{tied_autoencoder_forward_fused.1} parent=0 // pred_region
    _
  $region9: #{tied_autoencoder_forward_fused.1} parent=0 // pred_fallthru
    _
  // Predicated region
  $region10: #{tied_autoencoder_forward_fused.1} parent=0 // pred_check
    _
  $region11: #{tied_autoencoder_forward_fused.1} parent=0 // pred_check_branch
    %21 = sbr.rel (0) target = $region13
  $region12: #{tied_autoencoder_forward_fused.1} parent=0 // pred_region
    _
  $region13: #{tied_autoencoder_forward_fused.1} parent=0 // pred_fallthru
    _
  // Predicated region
  $region14: #{tied_autoencoder_forward_fused.1} parent=0 // pred_check
    _
  $region15: #{tied_autoencoder_forward_fused.1} parent=0 // pred_check_branch
    %23 = sbr.rel (0) target = $region17
  $region16: #{tied_autoencoder_forward_fused.1} parent=0 // pred_region
    _
  $region17: #{tied_autoencoder_forward_fused.1} parent=0 // pred_fallthru
    _
  // Predicated region
  $region18: #{tied_autoencoder_forward_fused.1} parent=0 // pred_check
    _
  $region19: #{tied_autoencoder_forward_fused.1} parent=0 // pred_check_branch
    %25 = sbr.rel (0) target = $region21
  $region20: #{tied_autoencoder_forward_fused.1} parent=0 // pred_region
    _
  $region21: #{tied_autoencoder_forward_fused.1} parent=0 // pred_fallthru
    _
  // Predicated region
  $region22: #{tied_autoencoder_forward_fused.1} parent=0 // pred_check
    _
  $region23: #{tied_autoencoder_forward_fused.1} parent=0 // pred_check_branch
    %27 = sbr.rel (0) target = $region25
  $region24: #{tied_autoencoder_forward_fused.1} parent=0 // pred_region
    _
  $region25: #{tied_autoencoder_forward_fused.1} parent=0 // pred_fallthru
    _
  // Predicated region
  $region26: #{tied_autoencoder_forward_fused.1} parent=0 // pred_check
    _
  $region27: #{tied_autoencoder_forward_fused.1} parent=0 // pred_check_branch
    %29 = sbr.rel (0) target = $region29
  $region28: #{tied_autoencoder_forward_fused.1} parent=0 // pred_region
    _
  $region29: #{tied_autoencoder_forward_fused.1} parent=0 // pred_fallthru
    _
  // Predicated region
  $region30: #{tied_autoencoder_forward_fused.1} parent=0 // pred_check
    _
  $region31: #{tied_autoencoder_forward_fused.1} parent=0 // pred_check_branch
    %31 = sbr.rel (0) target = $region33
  $region32: #{tied_autoencoder_forward_fused.1} parent=0 // pred_region
    _
  $region33: #{tied_autoencoder_forward_fused.1} parent=0 // pred_fallthru
    _
  // Predicated region
  $region34: #{tied_autoencoder_forward_fused.1} parent=0 // pred_check
    _
  $region35: #{tied_autoencoder_forward_fused.1} parent=0 // pred_check_branch
    %33 = sbr.rel (0) target = $region37
  $region36: #{tied_autoencoder_forward_fused.1} parent=0 // pred_region
    _
  $region37: #{tied_autoencoder_forward_fused.1} parent=0 // pred_fallthru
    _
  %v34 = vld [vmem:[%s0] sm:$0xff]
  %v35 = vld [vmem:[%s0 + $0x8] sm:$0xff]
  %v36 = vld [vmem:[%s1] sm:$0xff]
  %v37 = vld [vmem:[%s1 + $0x8] sm:$0xff]
  %v38 = vld [vmem:[%s1 + $0x10] sm:$0xff]
  %v39 = vld [vmem:[%s1 + $0x18] sm:$0xff]
  %v40 = vld [vmem:[%s1 + $0x20] sm:$0xff]
  %v41 = vld [vmem:[%s1 + $0x28] sm:$0xff]
  %v42 = vld [vmem:[%s1 + $0x30] sm:$0xff]
  %v43 = vld [vmem:[%s1 + $0x38] sm:$0xff]
  %v44 = vld [vmem:[%s3] sm:$0x1]
  %v46 = vperm.slane %v44, 0
  %vm48 = vcmask 523264
  %v50 = vsel %vm48, %v34, 0
  %v53 = vsel %vm48, %v35, 0
  %55 = vmatpush.msra.mxu0 0.0
  %56 = vmatpush.msra.mxu0 0.0
  %57 = vmatpush.msra.mxu0 0.0
  %58 = vmatpush.msra.mxu0 0.0
  %59 = vmatpush.msra.mxu0 0.0
  %60 = vmatpush.msra.mxu0 0.0
  %61 = vmatpush.msra.mxu0 0.0
  %62 = vmatpush.msra.mxu0 0.0
  %63 = vmatpush.msra.mxu0 %v43
  %64 = vmatpush.msra.mxu0 %v42
  %65 = vmatpush.msra.mxu0 %v41
  %66 = vmatpush.msra.mxu0 %v40
  %67 = vmatpush.msra.mxu0 %v39
  %68 = vmatpush.msra.mxu0 %v38
  %69 = vmatpush.msra.mxu0 %v37
  %70 = vmatpush.msra.mxu0 %v36
  %71 = vmatmul.f32.gmra.mxu0 %v50
  %v72 = vpop.f32.mrf.mxu0
  %v73 = vadd.f32 %v46, %v72
  %74 = vmatmul.f32.gmra.mxu0 %v53
  %v75 = vpop.f32.mrf.mxu0
  %v76 = vadd.f32 %v46, %v75
  %77 = vdwg.mxu0
  %v78 = vxor.u32 %v73, 2147483648
  %v79 = vxor.u32 %v76, 2147483648
  %v80 = vmul.f32 %v78, 1.442695
  %v81 = vpow.pop %v80
  %v82 = vmul.f32 %v79, 1.442695
  %v83 = vpow.pop %v82
  %v84 = vadd.f32 %v81, 1.0
  %v85 = vadd.f32 %v83, 1.0
  %v86 = vrcp.pop %v84
  %v87 = vmul.f32 %v84, %v86
  %v88 = vsub.f32 1.0, %v87
  %v89 = vmul.f32 %v86, %v88
  %v90 = vadd.f32 %v86, %v89
  %vm91 = vweird.f32 %v84
  %vm92 = vweird.f32 %v86
  %vm93 = vmor %vm91, %vm92
  %v94 = vsel %vm93, %v86, %v90
  %v95 = vand.u32 2147483647, %v84
  %vm96 = vcmp.eq.f32.partialorder %v95, 8.507059e+37
  %v97 = vand.u32 %v84, 2147483648
  %v98 = vor.u32 1.1754944e-38, %v97
  %v99 = vsel %vm96, %v98, %v94
  %v100 = vmul.f32 1.0, %v99
  %v101 = vrcp.pop %v85
  %v102 = vmul.f32 %v85, %v101
  %v103 = vsub.f32 1.0, %v102
  %v104 = vmul.f32 %v101, %v103
  %v105 = vadd.f32 %v101, %v104
  %vm106 = vweird.f32 %v85
  %vm107 = vweird.f32 %v101
  %vm108 = vmor %vm106, %vm107
  %v109 = vsel %vm108, %v101, %v105
  %v110 = vand.u32 2147483647, %v85
  %vm111 = vcmp.eq.f32.partialorder %v110, 8.507059e+37
  %v112 = vand.u32 %v85, 2147483648
  %v113 = vor.u32 1.1754944e-38, %v112
  %v114 = vsel %vm111, %v113, %v109
  %v115 = vmul.f32 1.0, %v114
  %v116 = vmul.f32 %v73, %v100
  %v117 = vmul.f32 %v76, %v115
  %v118 = vld [vmem:[%s2] sm:$0xff]
  %v119 = vld [vmem:[%s2 + $0x8] sm:$0xff]
  %v120 = vld [vmem:[%s2 + $0x10] sm:$0xff]
  %v121 = vld [vmem:[%s2 + $0x18] sm:$0xff]
  %v122 = vld [vmem:[%s4] sm:$0x1]
  %v124 = vperm.slane %v122, 0
  %vm126 = vcmask 261120
  %v128 = vsel %vm126, %v116, 0
  %v131 = vsel %vm126, %v117, 0
  %133 = vmatpush.msra.mxu0 0.0
  %134 = vmatpush.msra.mxu0 0.0
  %135 = vmatpush.msra.mxu0 0.0
  %136 = vmatpush.msra.mxu0 0.0
  %137 = vmatpush.msra.mxu0 0.0
  %138 = vmatpush.msra.mxu0 0.0
  %139 = vmatpush.msra.mxu0 0.0
  %140 = vmatpush.msra.mxu0 0.0
  %141 = vmatpush.msra.mxu0 0.0
  %142 = vmatpush.msra.mxu0 0.0
  %143 = vmatpush.msra.mxu0 0.0
  %144 = vmatpush.msra.mxu0 0.0
  %145 = vmatpush.msra.mxu0 %v121
  %146 = vmatpush.msra.mxu0 %v120
  %147 = vmatpush.msra.mxu0 %v119
  %148 = vmatpush.msra.mxu0 %v118
  %149 = vmatmul.f32.gmra.mxu0 %v128
  %v150 = vpop.f32.mrf.mxu0
  %v151 = vadd.f32 %v124, %v150
  %152 = vmatmul.f32.gmra.mxu0 %v131
  %v153 = vpop.f32.mrf.mxu0
  %v154 = vadd.f32 %v124, %v153
  %155 = vdwg.mxu0
  %156 = vst [vmem:[%s9] sm:$0xff] %v151
  %157 = vst [vmem:[%s9 + $0x8] sm:$0xff] %v154
  %v158 = vxor.u32 %v151, 2147483648
  %v159 = vxor.u32 %v154, 2147483648
  %v160 = vmul.f32 %v158, 1.442695
  %v161 = vpow.pop %v160
  %v162 = vmul.f32 %v159, 1.442695
  %v163 = vpow.pop %v162
  %v164 = vadd.f32 %v161, 1.0
  %v165 = vadd.f32 %v163, 1.0
  %v166 = vrcp.pop %v164
  %v167 = vmul.f32 %v164, %v166
  %v168 = vsub.f32 1.0, %v167
  %v169 = vmul.f32 %v166, %v168
  %v170 = vadd.f32 %v166, %v169
  %vm171 = vweird.f32 %v164
  %vm172 = vweird.f32 %v166
  %vm173 = vmor %vm171, %vm172
  %v174 = vsel %vm173, %v166, %v170
  %v175 = vand.u32 2147483647, %v164
  %vm176 = vcmp.eq.f32.partialorder %v175, 8.507059e+37
  %v177 = vand.u32 %v164, 2147483648
  %v178 = vor.u32 1.1754944e-38, %v177
  %v179 = vsel %vm176, %v178, %v174
  %v180 = vmul.f32 1.0, %v179
  %v181 = vrcp.pop %v165
  %v182 = vmul.f32 %v165, %v181
  %v183 = vsub.f32 1.0, %v182
  %v184 = vmul.f32 %v181, %v183
  %v185 = vadd.f32 %v181, %v184
  %vm186 = vweird.f32 %v165
  %vm187 = vweird.f32 %v181
  %vm188 = vmor %vm186, %vm187
  %v189 = vsel %vm188, %v181, %v185
  %v190 = vand.u32 2147483647, %v165
  %vm191 = vcmp.eq.f32.partialorder %v190, 8.507059e+37
  %v192 = vand.u32 %v165, 2147483648
  %v193 = vor.u32 1.1754944e-38, %v192
  %v194 = vsel %vm191, %v193, %v189
  %v195 = vmul.f32 1.0, %v194
  %v196 = vmul.f32 %v151, %v180
  %v197 = vmul.f32 %v154, %v195
  %v198 = vld [vmem:[%s5] sm:$0xff]
  %v199 = vld [vmem:[%s5 + $0x8] sm:$0xff]
  %v200 = vld [vmem:[%s5 + $0x10] sm:$0xff]
  %v201 = vld [vmem:[%s5 + $0x18] sm:$0xff]
  %v202 = vld [vmem:[%s5 + $0x20] sm:$0xff]
  %v203 = vld [vmem:[%s5 + $0x28] sm:$0xff]
  %v204 = vld [vmem:[%s5 + $0x30] sm:$0xff]
  %v205 = vld [vmem:[%s5 + $0x38] sm:$0xff]
  %v206 = vld [vmem:[%s5 + $0x40] sm:$0xff]
  %v207 = vld [vmem:[%s5 + $0x48] sm:$0xff]
  %v208 = vld [vmem:[%s5 + $0x50] sm:$0xff]
  %v209 = vld [vmem:[%s5 + $0x58] sm:$0xff]
  %v210 = vld [vmem:[%s5 + $0x60] sm:$0xff]
  %v211 = vld [vmem:[%s5 + $0x68] sm:$0xff]
  %v212 = vld [vmem:[%s5 + $0x70] sm:$0xff]
  %v213 = vld [vmem:[%s5 + $0x78] sm:$0xff]
  %v214 = vld [vmem:[%s7] sm:$0x1]
  %v216 = vperm.slane %v214, 0
  %218 = vmatpush.msra.mxu0 %v213
  %219 = vmatpush.msra.mxu0 %v212
  %220 = vmatpush.msra.mxu0 %v211
  %221 = vmatpush.msra.mxu0 %v210
  %222 = vmatpush.msra.mxu0 %v209
  %223 = vmatpush.msra.mxu0 %v208
  %224 = vmatpush.msra.mxu0 %v207
  %225 = vmatpush.msra.mxu0 %v206
  %226 = vmatpush.msra.mxu0 %v205
  %227 = vmatpush.msra.mxu0 %v204
  %228 = vmatpush.msra.mxu0 %v203
  %229 = vmatpush.msra.mxu0 %v202
  %230 = vmatpush.msra.mxu0 %v201
  %231 = vmatpush.msra.mxu0 %v200
  %232 = vmatpush.msra.mxu0 %v199
  %233 = vmatpush.msra.mxu0 %v198
  %234 = vmatmul.f32.gmra.mxu0 %v196
  %v235 = vpop.f32.mrf.mxu0
  %v236 = vadd.f32 %v216, %v235
  %237 = vmatmul.f32.gmra.mxu0 %v197
  %v238 = vpop.f32.mrf.mxu0
  %v239 = vadd.f32 %v216, %v238
  %240 = vdwg.mxu0
  %v241 = vxor.u32 %v236, 2147483648
  %v242 = vxor.u32 %v239, 2147483648
  %v243 = vmul.f32 %v241, 1.442695
  %v244 = vpow.pop %v243
  %v245 = vmul.f32 %v242, 1.442695
  %v246 = vpow.pop %v245
  %v247 = vadd.f32 %v244, 1.0
  %v248 = vadd.f32 %v246, 1.0
  %v249 = vrcp.pop %v247
  %v250 = vmul.f32 %v247, %v249
  %v251 = vsub.f32 1.0, %v250
  %v252 = vmul.f32 %v249, %v251
  %v253 = vadd.f32 %v249, %v252
  %vm254 = vweird.f32 %v247
  %vm255 = vweird.f32 %v249
  %vm256 = vmor %vm254, %vm255
  %v257 = vsel %vm256, %v249, %v253
  %v258 = vand.u32 2147483647, %v247
  %vm259 = vcmp.eq.f32.partialorder %v258, 8.507059e+37
  %v260 = vand.u32 %v247, 2147483648
  %v261 = vor.u32 1.1754944e-38, %v260
  %v262 = vsel %vm259, %v261, %v257
  %v263 = vmul.f32 1.0, %v262
  %v264 = vrcp.pop %v248
  %v265 = vmul.f32 %v248, %v264
  %v266 = vsub.f32 1.0, %v265
  %v267 = vmul.f32 %v264, %v266
  %v268 = vadd.f32 %v264, %v267
  %vm269 = vweird.f32 %v248
  %vm270 = vweird.f32 %v264
  %vm271 = vmor %vm269, %vm270
  %v272 = vsel %vm271, %v264, %v268
  %v273 = vand.u32 2147483647, %v248
  %vm274 = vcmp.eq.f32.partialorder %v273, 8.507059e+37
  %v275 = vand.u32 %v248, 2147483648
  %v276 = vor.u32 1.1754944e-38, %v275
  %v277 = vsel %vm274, %v276, %v272
  %v278 = vmul.f32 1.0, %v277
  %v279 = vmul.f32 %v236, %v263
  %v280 = vmul.f32 %v239, %v278
  %v281 = vld [vmem:[%s6] sm:$0xff]
  %v282 = vld [vmem:[%s6 + $0x8] sm:$0xff]
  %v283 = vld [vmem:[%s6 + $0x10] sm:$0xff]
  %v284 = vld [vmem:[%s6 + $0x18] sm:$0xff]
  %v285 = vld [vmem:[%s8] sm:$0x1]
  %v287 = vperm.slane %v285, 0
  %v290 = vsel %vm126, %v279, 0
  %v293 = vsel %vm126, %v280, 0
  %295 = vmatpush.msra.mxu0 0.0
  %296 = vmatpush.msra.mxu0 0.0
  %297 = vmatpush.msra.mxu0 0.0
  %298 = vmatpush.msra.mxu0 0.0
  %299 = vmatpush.msra.mxu0 0.0
  %300 = vmatpush.msra.mxu0 0.0
  %301 = vmatpush.msra.mxu0 0.0
  %302 = vmatpush.msra.mxu0 0.0
  %303 = vmatpush.msra.mxu0 0.0
  %304 = vmatpush.msra.mxu0 0.0
  %305 = vmatpush.msra.mxu0 0.0
  %306 = vmatpush.msra.mxu0 0.0
  %307 = vmatpush.msra.mxu0 %v284
  %308 = vmatpush.msra.mxu0 %v283
  %309 = vmatpush.msra.mxu0 %v282
  %310 = vmatpush.msra.mxu0 %v281
  %311 = vmatmul.f32.gmra.mxu0 %v290
  %v312 = vpop.f32.mrf.mxu0
  %v313 = vadd.f32 %v287, %v312
  %314 = vmatmul.f32.gmra.mxu0 %v293
  %v315 = vpop.f32.mrf.mxu0
  %v316 = vadd.f32 %v287, %v315
  %317 = vdwg.mxu0
  %318 = vst [vmem:[%s10] sm:$0xff] %v313
  %319 = vst [vmem:[%s10 + $0x8] sm:$0xff] %v316
  // Predicated region
  $region38: #{tied_autoencoder_forward_fused.1} parent=0 // pred_check
    _
  $region39: #{tied_autoencoder_forward_fused.1} parent=0 // pred_check_branch
    %321 = sbr.rel (0) target = $region41
  $region40: #{tied_autoencoder_forward_fused.1} parent=0 // pred_region
    _
  $region41: #{tied_autoencoder_forward_fused.1} parent=0 // pred_fallthru
    _
  // Predicated region
  $region42: #{tied_autoencoder_forward_fused.1} parent=0 // pred_check
    _
  $region43: #{tied_autoencoder_forward_fused.1} parent=0 // pred_check_branch
    %323 = sbr.rel (0) target = $region45
  $region44: #{tied_autoencoder_forward_fused.1} parent=0 // pred_region
    _
  $region45: #{tied_autoencoder_forward_fused.1} parent=0 // pred_fallthru
    _
  // Predicated region
  $region46: #{tied_autoencoder_forward_fused.1} parent=0 // pred_check
    _
  $region47: #{tied_autoencoder_forward_fused.1} parent=0 // pred_check_branch
    %325 = sbr.rel (0) target = $region49
  $region48: #{tied_autoencoder_forward_fused.1} parent=0 // pred_region
    _
  $region49: #{tied_autoencoder_forward_fused.1} parent=0 // pred_fallthru
    _
  // Predicated region
  $region50: #{tied_autoencoder_forward_fused.1} parent=0 // pred_check
    _
  $region51: #{tied_autoencoder_forward_fused.1} parent=0 // pred_check_branch
    %327 = sbr.rel (0) target = $region53
  $region52: #{tied_autoencoder_forward_fused.1} parent=0 // pred_region
    _
  $region53: #{tied_autoencoder_forward_fused.1} parent=0 // pred_fallthru
    _

</llo_original>
